<compile_context>
chip_gen: v7x
topology: tpu7x:2x2x1
jax: 0.10.0
libtpu: 0.0.40
codegen_flags: <defaults>
</compile_context>

<pallas_src>
import jax
import jax.numpy as jnp
from jax.experimental import pallas as pl
from jax.experimental.pallas import tpu as pltpu


def _round_up(n, m):
    return ((n + m - 1) // m) * m


def _choose_batch_tile(B, max_tile):
    """Batch rows per grid step (multiple of 8; multiple of 128 when large)."""
    if B <= 256:
        return _round_up(B, 8)              # one step; splitting only adds overhead
    # aim for exactly 2 big steps (keeps both v7x TensorCores busy), capped so
    # intermediates stay well inside VMEM on every generation.
    return min(max_tile, _round_up(pl.cdiv(B, 2), 128))


def critic_kernel(state_ref,   # (TB, S2)   f32
                  action_ref,  # (TB, A2)   f32
                  w0_ref,      # (S2, H0)   bf16
                  w1a_ref,     # (A2, H1)   bf16   (action slice of W1)
                  w1x_ref,     # (H0, H1)   bf16   (h0 slice of W1)
                  b0_ref,      # (1, H0)    f32
                  b1_ref,      # (1, H1)    f32
                  w2_ref,      # (1, H1)    f32    (output layer as a row)
                  b2_ref,      # (1, 1)     f32    in SMEM
                  out_ref):    # (TB, 1)    f32
    bf16 = jnp.bfloat16

    # bf16 casts happen on the VPU inside the kernel (no wrapper XLA cast op).
    s = state_ref[...].astype(bf16)
    a = action_ref[...].astype(bf16)

    # Layer 0: relu(state @ W0 + b0), f32 accumulation.
    h0 = jnp.dot(s, w0_ref[...], preferred_element_type=jnp.float32)
    h0 = jnp.maximum(h0 + b0_ref[...], 0.0)

    # Layer 1: relu(cat(h0, action) @ W1 + b1) == h0 @ W1x + action @ W1a + b1
    a1 = jnp.dot(a, w1a_ref[...], preferred_element_type=jnp.float32)
    h1 = (jnp.dot(h0.astype(bf16), w1x_ref[...],
                  preferred_element_type=jnp.float32)
          + a1 + b1_ref[...])
    h1 = jnp.maximum(h1, 0.0)

    # Output layer (N=1): VPU multiply + XLU lane reduction instead of an MXU
    # pass; b2 is a scalar read from SMEM.
    out = jnp.sum(h1 * w2_ref[...], axis=-1, keepdims=True) + b2_ref[0, 0]
    out_ref[...] = out.astype(out_ref.dtype)


def pack_critic_params(params):
    """One-time parameter packing (layout plumbing, hoisted out of forward).

    params: (w0[in0,H0], b0[1,H0], w1[H0+A2,H1], b1[1,H1], w2[H1,1], b2[1,1]),
    all stored transposed ([in, out]) relative to torch.nn.Linear.weight.
    """
    w0, b0, w1, b1, w2, b2 = params
    H0 = w0.shape[1]
    w0p = w0.astype(jnp.bfloat16)
    w1xp = w1[:H0, :].astype(jnp.bfloat16)   # h0 slice of W1
    w1ap = w1[H0:, :].astype(jnp.bfloat16)   # action slice of W1
    b0r = b0.reshape(1, -1).astype(jnp.float32)
    b1r = b1.reshape(1, -1).astype(jnp.float32)
    w2r = w2.reshape(1, -1).astype(jnp.float32)
    b2s = b2.reshape(1, 1).astype(jnp.float32)
    return (w0p, w1ap, w1xp, b0r, b1r, w2r, b2s)


def critic_forward(state, action, packed, *, max_block_batch=4096):
    """state: [B, 2*state_size] f32, action: [B, 2*action_size] f32 -> [B, 1] f32."""
    w0p, w1ap, w1xp, b0r, b1r, w2r, b2s = packed
    B, S2 = state.shape
    A2 = action.shape[1]
    H0 = w0p.shape[1]
    H1 = w1xp.shape[1]
    assert w0p.shape[0] == S2 and w1ap.shape[0] == A2 and w1xp.shape[0] == H0

    TB = _choose_batch_tile(B, max_block_batch)
    grid = (pl.cdiv(B, TB),)                 # ragged last block, no padding

    resident = lambda i: (0, 0)              # weights: same block every step
    batched = lambda i: (i, 0)               # activations / output

    return pl.pallas_call(
        critic_kernel,
        out_shape=jax.ShapeDtypeStruct((B, 1), jnp.float32),
        grid_spec=pltpu.PrefetchScalarGridSpec(
            num_scalar_prefetch=0,
            grid=grid,
            in_specs=[
                pl.BlockSpec((TB, S2), batched),                     # state
                pl.BlockSpec((TB, A2), batched),                     # action
                pl.BlockSpec((S2, H0), resident),                    # W0
                pl.BlockSpec((A2, H1), resident),                    # W1a
                pl.BlockSpec((H0, H1), resident),                    # W1x
                pl.BlockSpec((1, H0), resident),                     # b0
                pl.BlockSpec((1, H1), resident),                     # b1
                pl.BlockSpec((1, H1), resident),                     # w2 row
                pl.BlockSpec(memory_space=pltpu.MemorySpace.SMEM),   # b2 scalar
            ],
            out_specs=pl.BlockSpec((TB, 1), batched),
        ),
        compiler_params=pltpu.CompilerParams(
            dimension_semantics=("parallel",),
            vmem_limit_bytes=32 * 1024 * 1024,
        ),
    )(state, action, w0p, w1ap, w1xp, b0r, b1r, w2r, b2s)


def init_critic_params(key, state_size, action_size, hidden_layers=(256, 128)):
    """Deterministic synthetic init (weights stored transposed: [in, out]).

    hidden_init in the reference uses weight.size()[0] as 'fan_in'; the exact
    init values do not affect the forward-pass semantics being tested here.
    """
    h0, h1 = hidden_layers
    in0 = state_size * 2
    in1 = h0 + 2 * action_size

    k = jax.random.split(key, 6)

    lim0 = 1.0 / jnp.sqrt(jnp.float32(h0))
    w0 = jax.random.uniform(k[0], (in0, h0), jnp.float32, -lim0, lim0)
    b0 = jax.random.uniform(k[1], (1, h0), jnp.float32, -lim0, lim0)

    lim1 = 1.0 / jnp.sqrt(jnp.float32(h1))
    w1 = jax.random.uniform(k[2], (in1, h1), jnp.float32, -lim1, lim1)
    b1 = jax.random.uniform(k[3], (1, h1), jnp.float32, -lim1, lim1)

    w2 = jax.random.uniform(k[4], (h1, 1), jnp.float32, -3e-3, 3e-3)
    b2 = jax.random.uniform(k[5], (1, 1), jnp.float32, -3e-3, 3e-3)

    return (w0, b0, w1, b1, w2, b2)


def critic_ref(state, action, params):
    """Pure-JAX reference mirroring the kernel's bf16-operand / f32-acc numerics."""
    w0, b0, w1, b1, w2, b2 = params
    bf = lambda t: t.astype(jnp.bfloat16)
    h0 = jnp.maximum(
        jnp.dot(bf(state), bf(w0), preferred_element_type=jnp.float32) + b0, 0.0)
    x = jnp.concatenate([bf(h0), bf(action)], axis=1)
    h1 = jnp.maximum(
        jnp.dot(x, bf(w1), preferred_element_type=jnp.float32) + b1, 0.0)
    return h1 @ w2 + b2


if __name__ == "__main__":
    state_size = 16     # per-agent state  -> network input dim = 2*16 = 32
    action_size = 4     # per-agent action -> concatenated action dim = 8
    batch = 8

    key = jax.random.PRNGKey(0)
    k_s, k_a, k_p = jax.random.split(key, 3)

    state = jax.random.normal(k_s, (batch, 2 * state_size), jnp.float32)
    action = jax.random.normal(k_a, (batch, 2 * action_size), jnp.float32)
    params = init_critic_params(k_p, state_size, action_size)

    # One-time packing, outside the hot (jitted) forward path.
    packed = pack_critic_params(params)

    fwd = jax.jit(critic_forward)
    out = jax.block_until_ready(fwd(state, action, packed))

    ref = critic_ref(state, action, params)
    assert out.shape == (batch, 1)
    assert jnp.allclose(out, ref, atol=2e-3, rtol=1e-2), (
        float(jnp.max(jnp.abs(out - ref))))

    print("KERNEL_OK")
</pallas_src>

<mosaic_0001>
module attributes {stable_mosaic.version = 11 : i64} {
  func.func @critic_kernel(%arg0: i32, %arg1: memref<8x32xf32, #tpu.memory_space<vmem>>, %arg2: memref<8x8xf32, #tpu.memory_space<vmem>>, %arg3: memref<32x256xbf16, #tpu.memory_space<vmem>>, %arg4: memref<8x128xbf16, #tpu.memory_space<vmem>>, %arg5: memref<256x128xbf16, #tpu.memory_space<vmem>>, %arg6: memref<1x256xf32, #tpu.memory_space<vmem>>, %arg7: memref<1x128xf32, #tpu.memory_space<vmem>>, %arg8: memref<1x128xf32, #tpu.memory_space<vmem>>, %arg9: memref<1x1xf32, #tpu.memory_space<smem>>, %arg10: memref<8x1xf32, #tpu.memory_space<vmem>>) attributes {dimension_semantics = [#tpu.dimension_semantics<parallel>], iteration_bounds = array<i64: 1>, scalar_prefetch = 0 : i64, scratch_operands = 0 : i64, tpu.core_type = #tpu.core_type<tc>, window_params = [{transform_indices = @transform_0, window_bounds = array<i64: 8, 32>}, {transform_indices = @transform_1, window_bounds = array<i64: 8, 8>}, {pipeline_mode = #tpu.pipeline_mode<synchronous>, transform_indices = @transform_2, window_bounds = array<i64: 32, 256>}, {pipeline_mode = #tpu.pipeline_mode<synchronous>, transform_indices = @transform_3, window_bounds = array<i64: 8, 128>}, {pipeline_mode = #tpu.pipeline_mode<synchronous>, transform_indices = @transform_4, window_bounds = array<i64: 256, 128>}, {pipeline_mode = #tpu.pipeline_mode<synchronous>, transform_indices = @transform_5, window_bounds = array<i64: 1, 256>}, {pipeline_mode = #tpu.pipeline_mode<synchronous>, transform_indices = @transform_6, window_bounds = array<i64: 1, 128>}, {pipeline_mode = #tpu.pipeline_mode<synchronous>, transform_indices = @transform_7, window_bounds = array<i64: 1, 128>}, {transform_indices = @transform_8, window_bounds = array<i64: 1, 1>}, {transform_indices = @transform_9, window_bounds = array<i64: 8, 1>}]} {
    %c0 = arith.constant 0 : index
    %c0_0 = arith.constant 0 : index
    %0 = vector.load %arg1[%c0, %c0_0] : memref<8x32xf32, #tpu.memory_space<vmem>>, vector<8x32xf32>
    %1 = arith.truncf %0 : vector<8x32xf32> to vector<8x32xbf16>
    %c0_1 = arith.constant 0 : index
    %c0_2 = arith.constant 0 : index
    %2 = vector.load %arg2[%c0_1, %c0_2] : memref<8x8xf32, #tpu.memory_space<vmem>>, vector<8x8xf32>
    %3 = arith.truncf %2 : vector<8x8xf32> to vector<8x8xbf16>
    %c0_3 = arith.constant 0 : index
    %c0_4 = arith.constant 0 : index
    %4 = vector.load %arg3[%c0_3, %c0_4] : memref<32x256xbf16, #tpu.memory_space<vmem>>, vector<32x256xbf16>
    %cst = arith.constant dense<0.000000e+00> : vector<8x256xf32>
    %5 = tpu.matmul %1, %4, %cst {dimension_numbers = #tpu.dot_dimension_numbers<[1], [0], [0], [1], [0, 0, 1, 1], [], []>} : vector<8x32xbf16>, vector<32x256xbf16>, vector<8x256xf32> -> vector<8x256xf32>
    %c0_5 = arith.constant 0 : index
    %c0_6 = arith.constant 0 : index
    %6 = vector.load %arg6[%c0_5, %c0_6] : memref<1x256xf32, #tpu.memory_space<vmem>>, vector<1x256xf32>
    %7 = vector.broadcast %6 : vector<1x256xf32> to vector<8x256xf32>
    %8 = arith.addf %5, %7 : vector<8x256xf32>
    %cst_7 = arith.constant 0.000000e+00 : f32
    %9 = vector.broadcast %cst_7 : f32 to vector<8x256xf32>
    %10 = arith.maximumf %8, %9 : vector<8x256xf32>
    %c0_8 = arith.constant 0 : index
    %c0_9 = arith.constant 0 : index
    %11 = vector.load %arg4[%c0_8, %c0_9] : memref<8x128xbf16, #tpu.memory_space<vmem>>, vector<8x128xbf16>
    %cst_10 = arith.constant dense<0.000000e+00> : vector<8x128xf32>
    %12 = tpu.matmul %3, %11, %cst_10 {dimension_numbers = #tpu.dot_dimension_numbers<[1], [0], [0], [1], [0, 0, 1, 1], [], []>} : vector<8x8xbf16>, vector<8x128xbf16>, vector<8x128xf32> -> vector<8x128xf32>
    %13 = arith.truncf %10 : vector<8x256xf32> to vector<8x256xbf16>
    %c0_11 = arith.constant 0 : index
    %c0_12 = arith.constant 0 : index
    %14 = vector.load %arg5[%c0_11, %c0_12] : memref<256x128xbf16, #tpu.memory_space<vmem>>, vector<256x128xbf16>
    %cst_13 = arith.constant dense<0.000000e+00> : vector<8x128xf32>
    %15 = tpu.matmul %13, %14, %cst_13 {dimension_numbers = #tpu.dot_dimension_numbers<[1], [0], [0], [1], [0, 0, 1, 1], [], []>} : vector<8x256xbf16>, vector<256x128xbf16>, vector<8x128xf32> -> vector<8x128xf32>
    %16 = arith.addf %15, %12 : vector<8x128xf32>
    %c0_14 = arith.constant 0 : index
    %c0_15 = arith.constant 0 : index
    %17 = vector.load %arg7[%c0_14, %c0_15] : memref<1x128xf32, #tpu.memory_space<vmem>>, vector<1x128xf32>
    %18 = vector.broadcast %17 : vector<1x128xf32> to vector<8x128xf32>
    %19 = arith.addf %16, %18 : vector<8x128xf32>
    %cst_16 = arith.constant 0.000000e+00 : f32
    %20 = vector.broadcast %cst_16 : f32 to vector<8x128xf32>
    %21 = arith.maximumf %19, %20 : vector<8x128xf32>
    %c0_17 = arith.constant 0 : index
    %c0_18 = arith.constant 0 : index
    %22 = vector.load %arg8[%c0_17, %c0_18] : memref<1x128xf32, #tpu.memory_space<vmem>>, vector<1x128xf32>
    %23 = vector.broadcast %22 : vector<1x128xf32> to vector<8x128xf32>
    %24 = arith.mulf %21, %23 : vector<8x128xf32>
    %cst_19 = arith.constant dense<0.000000e+00> : vector<8xf32>
    %25 = vector.multi_reduction <add>, %24, %cst_19 [1] : vector<8x128xf32> to vector<8xf32>
    %26 = vector.shape_cast %25 : vector<8xf32> to vector<8x1xf32>
    %c0_20 = arith.constant 0 : index
    %c0_21 = arith.constant 0 : index
    %27 = memref.load %arg9[%c0_20, %c0_21] : memref<1x1xf32, #tpu.memory_space<smem>>
    %28 = vector.broadcast %27 : f32 to vector<8x1xf32>
    %29 = arith.addf %26, %28 : vector<8x1xf32>
    %c0_22 = arith.constant 0 : index
    %c0_23 = arith.constant 0 : index
    %30 = vector.load %arg10[%c0_22, %c0_23] : memref<8x1xf32, #tpu.memory_space<vmem>>, vector<8x1xf32>
    tpu.vector_store %arg10[%c0_22, %c0_23], %29 {strides = array<i32>} : memref<8x1xf32, #tpu.memory_space<vmem>>, vector<8x1xf32>,
    return
  }
  func.func @transform_0(%arg0: i32) -> (i32, i32) {
    %c0_i32 = arith.constant 0 : i32
    %c0_i32_0 = arith.constant 0 : i32
    return %arg0, %c0_i32 : i32, i32
  }
  func.func @transform_1(%arg0: i32) -> (i32, i32) {
    %c0_i32 = arith.constant 0 : i32
    %c0_i32_0 = arith.constant 0 : i32
    return %arg0, %c0_i32 : i32, i32
  }
  func.func @transform_2(%arg0: i32) -> (i32, i32) {
    %c0_i32 = arith.constant 0 : i32
    %c0_i32_0 = arith.constant 0 : i32
    %c0_i32_1 = arith.constant 0 : i32
    return %c0_i32, %c0_i32_0 : i32, i32
  }
  func.func @transform_3(%arg0: i32) -> (i32, i32) {
    %c0_i32 = arith.constant 0 : i32
    %c0_i32_0 = arith.constant 0 : i32
    %c0_i32_1 = arith.constant 0 : i32
    return %c0_i32, %c0_i32_0 : i32, i32
  }
  func.func @transform_4(%arg0: i32) -> (i32, i32) {
    %c0_i32 = arith.constant 0 : i32
    %c0_i32_0 = arith.constant 0 : i32
    %c0_i32_1 = arith.constant 0 : i32
    return %c0_i32, %c0_i32_0 : i32, i32
  }
  func.func @transform_5(%arg0: i32) -> (i32, i32) {
    %c0_i32 = arith.constant 0 : i32
    %c0_i32_0 = arith.constant 0 : i32
    %c0_i32_1 = arith.constant 0 : i32
    return %c0_i32, %c0_i32_0 : i32, i32
  }
  func.func @transform_6(%arg0: i32) -> (i32, i32) {
    %c0_i32 = arith.constant 0 : i32
    %c0_i32_0 = arith.constant 0 : i32
    %c0_i32_1 = arith.constant 0 : i32
    return %c0_i32, %c0_i32_0 : i32, i32
  }
  func.func @transform_7(%arg0: i32) -> (i32, i32) {
    %c0_i32 = arith.constant 0 : i32
    %c0_i32_0 = arith.constant 0 : i32
    %c0_i32_1 = arith.constant 0 : i32
    return %c0_i32, %c0_i32_0 : i32, i32
  }
  func.func @transform_8(%arg0: i32) -> (i32, i32) {
    %c0_i32 = arith.constant 0 : i32
    %c0_i32_0 = arith.constant 0 : i32
    %c0_i32_1 = arith.constant 0 : i32
    return %c0_i32, %c0_i32_0 : i32, i32
  }
  func.func @transform_9(%arg0: i32) -> (i32, i32) {
    %c0_i32 = arith.constant 0 : i32
    %c0_i32_0 = arith.constant 0 : i32
    return %arg0, %c0_i32 : i32, i32
  }
}

</mosaic_0001>

<llo_original>
// kernel: critic_forward.1
$region0: #{critic_forward.1}
  #allocation0 [shape = 'u32[]', space=smem, size = 0x4, offset = 0x4, fixed_abs, tag = 'smem constant byte address 0x4 - core index']
  #allocation1 [shape = 'u32[144,128]{1,0:T(1,128)}', space=vmem, size = 0x12000, scoped, tag = 'internal scratch']
  #allocation2 [shape = 'f32[1,1]{1,0:T(1,128)S(6)}', space=smem, size = 0x200, scoped, tag = 'scoped memory for critic_forward.1']
  %s0 = inlined_call_operand.hbm [shape: f32[8,32], index: 0, kind: input, shape index: {}]
  %s1 = inlined_call_operand.hbm [shape: f32[8,8], index: 1, kind: input, shape index: {}]
  %s2 = inlined_call_operand.hbm [shape: bf16[32,256], index: 2, kind: input, shape index: {}]
  %s3 = inlined_call_operand.vmem [shape: bf16[8,128], index: 3, kind: input, shape index: {}]
  %s4 = inlined_call_operand.hbm [shape: bf16[256,128], index: 4, kind: input, shape index: {}]
  %s5 = inlined_call_operand.vmem [shape: f32[1,256], index: 5, kind: input, shape index: {}]
  %s6 = inlined_call_operand.vmem [shape: f32[1,128], index: 6, kind: input, shape index: {}]
  %s7 = inlined_call_operand.vmem [shape: f32[1,128], index: 7, kind: input, shape index: {}]
  %s8 = inlined_call_operand.<no memory space> [shape: f32[1,1], index: 8, kind: input, shape index: {}]
  %s9 = inlined_call_operand.vmem [shape: f32[8,1], index: 9, kind: output, shape index: {}]
  %s10 = sld [smem:[#allocation0]]
  $region62: #{critic_forward.1} parent=0
    _
  %s12 = ssub.s32 1, %s10
  %s13 = scalar_select 0, %s12, %s10
  %14 = sst [smem:[#allocation2]] %s8
  $region1: #{critic_forward.1} parent=0
    #allocation3 [shape = 'u8[4096]{0}', space=vmem, size = 0x1000, scoped, tag = 'input window, operand 0, single buffered']
    #allocation4 [shape = 's32[1]{0}', space=sflag, size = 0x4, scoped, tag = 'scoped memory for critic_forward.1']
    #allocation5 [shape = 'u8[4096]{0}', space=vmem, size = 0x1000, scoped, tag = 'input window, operand 1, single buffered']
    #allocation6 [shape = 's32[1]{0}', space=sflag, size = 0x4, scoped, tag = 'scoped memory for critic_forward.1']
    #allocation7 [shape = 'u8[16384]{0}', space=vmem, size = 0x4000, scoped, tag = 'input window, operand 2, single buffered']
    #allocation8 [shape = 'u8[65536]{0}', space=vmem, size = 0x10000, scoped, tag = 'input window, operand 4, single buffered']
    #allocation9 [shape = 's32[1]{0}', space=sflag, size = 0x4, scoped, tag = 'scoped memory for critic_forward.1']
    %15 = vsyncpa [#allocation4], 0
    %16 = vsyncpa [#allocation6], 0
    %17 = vsyncpa [#allocation9], 0
    // Predicated region
    $region2: #{critic_forward.1} parent=1 // pred_check
      _
    $region3: #{critic_forward.1} parent=1 // pred_check_branch
      %19 = sbr.rel (0) target = $region5
    $region4: #{critic_forward.1} parent=1 // pred_region
      %s21 = ssub.s32 128, 128
      %22 = vsyncadd [#allocation4], %s21
      %s24 = sshll.u32 [#allocation3], 4
      %s25 = int_to_ptr.vmem [resolvable:$true] %s24
      %27 = dma.hbm_to_vmem [thread:$0]  %s0, 128, %s25, [#allocation4]
    $region5: #{critic_forward.1} parent=1 // pred_fallthru
      _
    // Predicated region
    $region6: #{critic_forward.1} parent=1 // pred_check
      _
    $region7: #{critic_forward.1} parent=1 // pred_check_branch
      %29 = sbr.rel (0) target = $region9
    $region8: #{critic_forward.1} parent=1 // pred_region
      %s31 = ssub.s32 128, 128
      %32 = vsyncadd [#allocation6], %s31
      %s34 = sshll.u32 [#allocation5], 4
      %s35 = int_to_ptr.vmem [resolvable:$true] %s34
      %37 = dma.hbm_to_vmem [thread:$0]  %s1, 128, %s35, [#allocation6]
    $region9: #{critic_forward.1} parent=1 // pred_fallthru
      _
    // Predicated region
    $region10: #{critic_forward.1} parent=1 // pred_check
      _
    $region11: #{critic_forward.1} parent=1 // pred_check_branch
      %39 = sbr.rel (0) target = $region13
    $region12: #{critic_forward.1} parent=1 // pred_region
      %s41 = ssub.s32 512, 512
      %42 = vsyncadd [#allocation6], %s41
      %s43 = sshll.u32 [#allocation7], 4
      %s44 = int_to_ptr.vmem [resolvable:$true] %s43
      %49 = dma.hbm_to_vmem [thread:$0]  %s2, 512, %s44, [#allocation6], 128, 128, 8
    $region13: #{critic_forward.1} parent=1 // pred_fallthru
      _
    // Predicated region
    $region14: #{critic_forward.1} parent=1 // pred_check
      _
    $region15: #{critic_forward.1} parent=1 // pred_check_branch
      %51 = sbr.rel (0) target = $region17
    $region16: #{critic_forward.1} parent=1 // pred_region
      _
    $region17: #{critic_forward.1} parent=1 // pred_fallthru
      _
    // Predicated region
    $region18: #{critic_forward.1} parent=1 // pred_check
      _
    $region19: #{critic_forward.1} parent=1 // pred_check_branch
      %53 = sbr.rel (0) target = $region21
    $region20: #{critic_forward.1} parent=1 // pred_region
      %s55 = ssub.s32 2048, 2048
      %56 = vsyncadd [#allocation9], %s55
      %s57 = sshll.u32 [#allocation8], 4
      %s58 = int_to_ptr.vmem [resolvable:$true] %s57
      %63 = dma.hbm_to_vmem [thread:$0]  %s4, 2048, %s58, [#allocation9], 64, 64, 4
    $region21: #{critic_forward.1} parent=1 // pred_fallthru
      _
    // Predicated region
    $region22: #{critic_forward.1} parent=1 // pred_check
      _
    $region23: #{critic_forward.1} parent=1 // pred_check_branch
      %65 = sbr.rel (0) target = $region25
    $region24: #{critic_forward.1} parent=1 // pred_region
      _
    $region25: #{critic_forward.1} parent=1 // pred_fallthru
      _
    // Predicated region
    $region26: #{critic_forward.1} parent=1 // pred_check
      _
    $region27: #{critic_forward.1} parent=1 // pred_check_branch
      %67 = sbr.rel (0) target = $region29
    $region28: #{critic_forward.1} parent=1 // pred_region
      _
    $region29: #{critic_forward.1} parent=1 // pred_fallthru
      _
    // Predicated region
    $region30: #{critic_forward.1} parent=1 // pred_check
      _
    $region31: #{critic_forward.1} parent=1 // pred_check_branch
      %69 = sbr.rel (0) target = $region33
    $region32: #{critic_forward.1} parent=1 // pred_region
      _
    $region33: #{critic_forward.1} parent=1 // pred_fallthru
      _
    // Predicated region
    $region34: #{critic_forward.1} parent=1 // pred_check
      _
    $region35: #{critic_forward.1} parent=1 // pred_check_branch
      %71 = sbr.rel (0) target = $region37
    $region36: #{critic_forward.1} parent=1 // pred_region
      _
    $region37: #{critic_forward.1} parent=1 // pred_fallthru
      _
    // Predicated region
    $region38: #{critic_forward.1} parent=1 // pred_check
      _
    $region39: #{critic_forward.1} parent=1 // pred_check_branch
      %73 = sbr.rel (0) target = $region41
    $region40: #{critic_forward.1} parent=1 // pred_region
      %74 = dma.done [#allocation4], 128
    $region41: #{critic_forward.1} parent=1 // pred_fallthru
      _
    // Predicated region
    $region42: #{critic_forward.1} parent=1 // pred_check
      _
    $region43: #{critic_forward.1} parent=1 // pred_check_branch
      %76 = sbr.rel (0) target = $region45
    $region44: #{critic_forward.1} parent=1 // pred_region
      %77 = dma.done [#allocation6], 128
    $region45: #{critic_forward.1} parent=1 // pred_fallthru
      _
    // Predicated region
    $region46: #{critic_forward.1} parent=1 // pred_check
      _
    $region47: #{critic_forward.1} parent=1 // pred_check_branch
      %79 = sbr.rel (0) target = $region49
    $region48: #{critic_forward.1} parent=1 // pred_region
      %80 = dma.done [#allocation6], 512
    $region49: #{critic_forward.1} parent=1 // pred_fallthru
      _
    // Predicated region
    $region50: #{critic_forward.1} parent=1 // pred_check
      _
    $region51: #{critic_forward.1} parent=1 // pred_check_branch
      %82 = sbr.rel (0) target = $region53
    $region52: #{critic_forward.1} parent=1 // pred_region
      %83 = dma.done [#allocation9], 2048
    $region53: #{critic_forward.1} parent=1 // pred_fallthru
      _
    %v85 = vld [vmem:[#allocation3] sm:$0xff]
    %v86 = vpack.c.bf16 %v85, %v85
    %v87 = vld [vmem:[#allocation5] sm:$0xff]
    %v88 = vpack.c.bf16 %v87, %v87
    %v89 = vld [vmem:[#allocation7] sm:$0xff]
    %v90 = vld [vmem:[#allocation7 + $0x8] sm:$0xff]
    %v91 = vld [vmem:[#allocation7 + $0x10] sm:$0xff]
    %v92 = vld [vmem:[#allocation7 + $0x18] sm:$0xff]
    %v93 = vld [vmem:[%s5] sm:$0x3]
    %v95 = vlaneseq
    %v96 = vshrl.u32 %v95, 7
    %v97 = vsub.s32 0, %v96
    %v98 = vrot.slane %v93, %v97
    %v99 = vlaneseq
    %v100 = vshrl.u32 %v99, 7
    %v101 = vsub.s32 1, %v100
    %v102 = vrot.slane %v93, %v101
    %v109 = vunpack.c.l.b16 %v89
    %v110 = vunpack.c.h.b16 %v89
    %v111 = vunpack.c.l.b16 %v90
    %v112 = vunpack.c.h.b16 %v90
    %v113 = vunpack.c.l.b16 %v91
    %v114 = vunpack.c.h.b16 %v91
    %v115 = vunpack.c.l.b16 %v92
    %v116 = vunpack.c.h.b16 %v92
    %v117 = vpack.c.b16 %v111, %v109
    %v118 = vpack.c.b16 %v112, %v110
    %v119 = vpack.c.b16 %v115, %v113
    %v120 = vpack.c.b16 %v116, %v114
    %vm125 = vcmask 261120
    %v127 = vsel %vm125, %v86, 0
    %129 = vmatprep.subr.bf16.mxu0 %v118
    %130 = vmatpush1.bf16.msra.mxu0 %v117
    %131 = vmatprep.subr.bf16.mxu0 %v120
    %132 = vmatpush1.bf16.msra.mxu0 %v119
    %133 = vmatprep.subr.bf16.mxu0 0
    %134 = vmatpush1.bf16.msra.mxu0 0
    %135 = vmatprep.subr.bf16.mxu0 0
    %136 = vmatpush1.bf16.msra.mxu0 0
    %137 = vmatprep.subr.bf16.mxu0 0
    %138 = vmatpush1.bf16.msra.mxu0 0
    %139 = vmatprep.subr.bf16.mxu0 0
    %140 = vmatpush1.bf16.msra.mxu0 0
    %141 = vmatprep.subr.bf16.mxu0 0
    %142 = vmatpush1.bf16.msra.mxu0 0
    %143 = vmatprep.subr.bf16.mxu0 0
    %144 = vmatpush1.bf16.msra.mxu0 0
    %145 = vmatprep.subr.bf16.mxu0 0
    %146 = vmatpush1.bf16.msra.mxu0 0
    %147 = vmatprep.subr.bf16.mxu0 0
    %148 = vmatpush1.bf16.msra.mxu0 0
    %149 = vmatprep.subr.bf16.mxu0 0
    %150 = vmatpush1.bf16.msra.mxu0 0
    %151 = vmatprep.subr.bf16.mxu0 0
    %152 = vmatpush1.bf16.msra.mxu0 0
    %153 = vmatprep.subr.bf16.mxu0 0
    %154 = vmatpush1.bf16.msra.mxu0 0
    %155 = vmatprep.subr.bf16.mxu0 0
    %156 = vmatpush1.bf16.msra.mxu0 0
    %157 = vmatprep.subr.bf16.mxu0 0
    %158 = vmatpush1.bf16.msra.mxu0 0
    %159 = vmatprep.subr.bf16.mxu0 0
    %160 = vmatpush1.bf16.msra.mxu0 0
    %161 = vmatprep.mubr.bf16.mxu0 0
    %162 = vmatmul.mubr.bf16.gmra.mrb[0].mxu0 %v127
    %v163 = vpop.f32.mrb[0].mxu0
    %v164 = vadd.f32 %v98, %v163
    %v165 = vpop.f32.mrb[0].mxu0
    %v166 = vadd.f32 %v102, %v165
    %v167 = vpop.f32.mrb[0].mxu0
    %v168 = vpop.f32.mrb[0].mxu0
    %169 = vdwg.mxu0
    %v170 = vmax.f32 %v164, 0.0
    %v171 = vmax.f32 %v166, 0.0
    %v172 = vld [vmem:[%s3] sm:$0xf]
    %vm173 = vcmask 64512
    %v175 = vsel %vm173, %v88, 0
    %vm177 = vcmask 1043456
    %v179 = vsel %vm177, %v172, 0
    %181 = vmatprep.subr.bf16.mxu0 0
    %182 = vmatpush1.bf16.msra.mxu0 %v179
    %183 = vmatprep.subr.bf16.mxu0 0
    %184 = vmatpush1.bf16.msra.mxu0 0
    %185 = vmatprep.subr.bf16.mxu0 0
    %186 = vmatpush1.bf16.msra.mxu0 0
    %187 = vmatprep.subr.bf16.mxu0 0
    %188 = vmatpush1.bf16.msra.mxu0 0
    %189 = vmatprep.subr.bf16.mxu0 0
    %190 = vmatpush1.bf16.msra.mxu0 0
    %191 = vmatprep.subr.bf16.mxu0 0
    %192 = vmatpush1.bf16.msra.mxu0 0
    %193 = vmatprep.subr.bf16.mxu0 0
    %194 = vmatpush1.bf16.msra.mxu0 0
    %195 = vmatprep.subr.bf16.mxu0 0
    %196 = vmatpush1.bf16.msra.mxu0 0
    %197 = vmatprep.subr.bf16.mxu0 0
    %198 = vmatpush1.bf16.msra.mxu0 0
    %199 = vmatprep.subr.bf16.mxu0 0
    %200 = vmatpush1.bf16.msra.mxu0 0
    %201 = vmatprep.subr.bf16.mxu0 0
    %202 = vmatpush1.bf16.msra.mxu0 0
    %203 = vmatprep.subr.bf16.mxu0 0
    %204 = vmatpush1.bf16.msra.mxu0 0
    %205 = vmatprep.subr.bf16.mxu0 0
    %206 = vmatpush1.bf16.msra.mxu0 0
    %207 = vmatprep.subr.bf16.mxu0 0
    %208 = vmatpush1.bf16.msra.mxu0 0
    %209 = vmatprep.subr.bf16.mxu0 0
    %210 = vmatpush1.bf16.msra.mxu0 0
    %211 = vmatprep.subr.bf16.mxu0 0
    %212 = vmatpush1.bf16.msra.mxu0 0
    %213 = vmatprep.mubr.bf16.mxu0 0
    %214 = vmatmul.mubr.bf16.gmra.mrb[0].mxu0 %v175
    %v215 = vpop.f32.mrb[0].mxu0
    %v216 = vadd.f32 0.0, %v215
    %v217 = vpop.f32.mrb[0].mxu0
    %v218 = vpop.f32.mrb[0].mxu0
    %v219 = vpop.f32.mrb[0].mxu0
    %220 = vdwg.mxu0
    %v221 = vpack.c.bf16 %v170, %v170
    %v222 = vpack.c.bf16 %v171, %v171
    %v223 = vld [vmem:[#allocation8] sm:$0xf]
    %v224 = vld [vmem:[#allocation8 + $0x4] sm:$0xf]
    %v225 = vld [vmem:[#allocation8 + $0x8] sm:$0xf]
    %v226 = vld [vmem:[#allocation8 + $0xc] sm:$0xf]
    %v227 = vld [vmem:[#allocation8 + $0x10] sm:$0xf]
    %v228 = vld [vmem:[#allocation8 + $0x14] sm:$0xf]
    %v229 = vld [vmem:[#allocation8 + $0x18] sm:$0xf]
    %v230 = vld [vmem:[#allocation8 + $0x1c] sm:$0xf]
    %v231 = vld [vmem:[#allocation8 + $0x20] sm:$0xf]
    %v232 = vld [vmem:[#allocation8 + $0x24] sm:$0xf]
    %v233 = vld [vmem:[#allocation8 + $0x28] sm:$0xf]
    %v234 = vld [vmem:[#allocation8 + $0x2c] sm:$0xf]
    %v235 = vld [vmem:[#allocation8 + $0x30] sm:$0xf]
    %v236 = vld [vmem:[#allocation8 + $0x34] sm:$0xf]
    %v237 = vld [vmem:[#allocation8 + $0x38] sm:$0xf]
    %v238 = vld [vmem:[#allocation8 + $0x3c] sm:$0xf]
    %v239 = vld [vmem:[#allocation8 + $0x40] sm:$0xf]
    %v240 = vld [vmem:[#allocation8 + $0x44] sm:$0xf]
    %v241 = vld [vmem:[#allocation8 + $0x48] sm:$0xf]
    %v242 = vld [vmem:[#allocation8 + $0x4c] sm:$0xf]
    %v243 = vld [vmem:[#allocation8 + $0x50] sm:$0xf]
    %v244 = vld [vmem:[#allocation8 + $0x54] sm:$0xf]
    %v245 = vld [vmem:[#allocation8 + $0x58] sm:$0xf]
    %v246 = vld [vmem:[#allocation8 + $0x5c] sm:$0xf]
    %v247 = vld [vmem:[#allocation8 + $0x60] sm:$0xf]
    %v248 = vld [vmem:[#allocation8 + $0x64] sm:$0xf]
    %v249 = vld [vmem:[#allocation8 + $0x68] sm:$0xf]
    %v250 = vld [vmem:[#allocation8 + $0x6c] sm:$0xf]
    %v251 = vld [vmem:[#allocation8 + $0x70] sm:$0xf]
    %v252 = vld [vmem:[#allocation8 + $0x74] sm:$0xf]
    %v253 = vld [vmem:[#allocation8 + $0x78] sm:$0xf]
    %v254 = vld [vmem:[#allocation8 + $0x7c] sm:$0xf]
    %v287 = vunpack.c.l.b16 %v223
    %v288 = vunpack.c.l.b16 %v224
    %v289 = vunpack.c.l.b16 %v225
    %v290 = vunpack.c.l.b16 %v226
    %v291 = vunpack.c.l.b16 %v227
    %v292 = vunpack.c.l.b16 %v228
    %v293 = vunpack.c.l.b16 %v229
    %v294 = vunpack.c.l.b16 %v230
    %v295 = vunpack.c.l.b16 %v231
    %v296 = vunpack.c.l.b16 %v232
    %v297 = vunpack.c.l.b16 %v233
    %v298 = vunpack.c.l.b16 %v234
    %v299 = vunpack.c.l.b16 %v235
    %v300 = vunpack.c.l.b16 %v236
    %v301 = vunpack.c.l.b16 %v237
    %v302 = vunpack.c.l.b16 %v238
    %v303 = vunpack.c.l.b16 %v239
    %v304 = vunpack.c.l.b16 %v240
    %v305 = vunpack.c.l.b16 %v241
    %v306 = vunpack.c.l.b16 %v242
    %v307 = vunpack.c.l.b16 %v243
    %v308 = vunpack.c.l.b16 %v244
    %v309 = vunpack.c.l.b16 %v245
    %v310 = vunpack.c.l.b16 %v246
    %v311 = vunpack.c.l.b16 %v247
    %v312 = vunpack.c.l.b16 %v248
    %v313 = vunpack.c.l.b16 %v249
    %v314 = vunpack.c.l.b16 %v250
    %v315 = vunpack.c.l.b16 %v251
    %v316 = vunpack.c.l.b16 %v252
    %v317 = vunpack.c.l.b16 %v253
    %v318 = vunpack.c.l.b16 %v254
    %v319 = vpack.c.b16 %v288, %v287
    %v320 = vpack.c.b16 %v290, %v289
    %v321 = vpack.c.b16 %v292, %v291
    %v322 = vpack.c.b16 %v294, %v293
    %v323 = vpack.c.b16 %v296, %v295
    %v324 = vpack.c.b16 %v298, %v297
    %v325 = vpack.c.b16 %v300, %v299
    %v326 = vpack.c.b16 %v302, %v301
    %v327 = vpack.c.b16 %v304, %v303
    %v328 = vpack.c.b16 %v306, %v305
    %v329 = vpack.c.b16 %v308, %v307
    %v330 = vpack.c.b16 %v310, %v309
    %v331 = vpack.c.b16 %v312, %v311
    %v332 = vpack.c.b16 %v314, %v313
    %v333 = vpack.c.b16 %v316, %v315
    %v334 = vpack.c.b16 %v318, %v317
    %351 = vmatprep.subr.bf16.mxu0 0
    %352 = vmatpush1.bf16.msra.mxu0 %v319
    %353 = vmatprep.subr.bf16.mxu0 0
    %354 = vmatpush1.bf16.msra.mxu0 %v320
    %355 = vmatprep.subr.bf16.mxu0 0
    %356 = vmatpush1.bf16.msra.mxu0 %v321
    %357 = vmatprep.subr.bf16.mxu0 0
    %358 = vmatpush1.bf16.msra.mxu0 %v322
    %359 = vmatprep.subr.bf16.mxu0 0
    %360 = vmatpush1.bf16.msra.mxu0 %v323
    %361 = vmatprep.subr.bf16.mxu0 0
    %362 = vmatpush1.bf16.msra.mxu0 %v324
    %363 = vmatprep.subr.bf16.mxu0 0
    %364 = vmatpush1.bf16.msra.mxu0 %v325
    %365 = vmatprep.subr.bf16.mxu0 0
    %366 = vmatpush1.bf16.msra.mxu0 %v326
    %367 = vmatprep.subr.bf16.mxu0 0
    %368 = vmatpush1.bf16.msra.mxu0 %v327
    %369 = vmatprep.subr.bf16.mxu0 0
    %370 = vmatpush1.bf16.msra.mxu0 %v328
    %371 = vmatprep.subr.bf16.mxu0 0
    %372 = vmatpush1.bf16.msra.mxu0 %v329
    %373 = vmatprep.subr.bf16.mxu0 0
    %374 = vmatpush1.bf16.msra.mxu0 %v330
    %375 = vmatprep.subr.bf16.mxu0 0
    %376 = vmatpush1.bf16.msra.mxu0 %v331
    %377 = vmatprep.subr.bf16.mxu0 0
    %378 = vmatpush1.bf16.msra.mxu0 %v332
    %379 = vmatprep.subr.bf16.mxu0 0
    %380 = vmatpush1.bf16.msra.mxu0 %v333
    %381 = vmatprep.subr.bf16.mxu0 0
    %382 = vmatpush1.bf16.msra.mxu0 %v334
    %383 = vmatprep.mubr.bf16.mxu0 %v222
    %384 = vmatmul.mubr.bf16.gmra.mrb[0].mxu0 %v221
    %v385 = vpop.f32.mrb[0].mxu0
    %v386 = vadd.f32 %v216, %v385
    %v387 = vpop.f32.mrb[0].mxu0
    %v388 = vpop.f32.mrb[0].mxu0
    %v389 = vpop.f32.mrb[0].mxu0
    %390 = vdwg.mxu0
    %v391 = vld [vmem:[%s6] sm:$0x1]
    %v393 = vlaneseq
    %v394 = vshrl.u32 %v393, 7
    %v395 = vsub.s32 0, %v394
    %v396 = vrot.slane %v391, %v395
    %v398 = vadd.f32 %v386, %v396
    %v399 = vmax.f32 %v398, 0.0
    %v400 = vld [vmem:[%s7] sm:$0x1]
    %v402 = vlaneseq
    %v403 = vshrl.u32 %v402, 7
    %v404 = vsub.s32 0, %v403
    %v405 = vrot.slane %v400, %v404
    %v407 = vmul.f32 %v399, %v405
    %408 = vadd.xlane.f32.xlu0 %v407
    %v409 = vpop.xlane.xlu0 %408
    %s410 = sld [smem:[#allocation2]]
    %v411 = vstv %s410
    %v412 = vadd.f32 %v409, %v411
    %vm413 = vcmask 7168
    %414 = vst.msk [vmem:[%s9] sm:$0xff] %vm413, %v412
    // Predicated region
    $region54: #{critic_forward.1} parent=1 // pred_check
      _
    $region55: #{critic_forward.1} parent=1 // pred_check_branch
      %416 = sbr.rel (0) target = $region57
    $region56: #{critic_forward.1} parent=1 // pred_region
      _
    $region57: #{critic_forward.1} parent=1 // pred_fallthru
      _
    // Predicated region
    $region58: #{critic_forward.1} parent=1 // pred_check
      _
    $region59: #{critic_forward.1} parent=1 // pred_check_branch
      %418 = sbr.rel (0) target = $region61
    $region60: #{critic_forward.1} parent=1 // pred_region
      _
    $region61: #{critic_forward.1} parent=1 // pred_fallthru
      _
    %419 = vsyncpa [#allocation4], 1
    %420 = vsyncpa [#allocation6], 1
    %421 = vsyncpa [#allocation9], 1

</llo_original>
